<compile_context>
chip_gen: v7x
topology: tpu7x:2x2x1
jax: 0.10.0
libtpu: 0.0.40
codegen_flags: <defaults>
</compile_context>

<pallas_src>
import math

import jax
import jax.numpy as jnp
from jax.experimental import pallas as pl
from jax.experimental.pallas import tpu as pltpu

N = 19
MYN = N * (N - 1) // 2            # 171
OBS = 2 * MYN                     # 342 input features
OBS_PAD = 384                     # padded to 3 * 128 lanes

FIRST = 128
SECOND = 64
THIRD = 32


def _round_up(n, m):
    return ((n + m - 1) // m) * m


def mlp_kernel(x_ref,
               w1_ref, b1_ref,
               w2_ref, b2_ref,
               w3_ref, b3_ref,
               w4_ref, b4_ref,
               o_ref):
    """One batch tile of the 4-layer MLP. Weights stay VMEM-resident."""
    cdt = w1_ref.dtype                       # matmul operand dtype (f32 or bf16)

    x = x_ref[...]                           # (TB, OBS_PAD)

    h = jnp.dot(x, w1_ref[...], preferred_element_type=jnp.float32) + b1_ref[...]
    h = jnp.maximum(h, 0.0).astype(cdt)      # (TB, FIRST)

    h = jnp.dot(h, w2_ref[...], preferred_element_type=jnp.float32) + b2_ref[...]
    h = jnp.maximum(h, 0.0).astype(cdt)      # (TB, SECOND)

    h = jnp.dot(h, w3_ref[...], preferred_element_type=jnp.float32) + b3_ref[...]
    h = jnp.maximum(h, 0.0)                  # (TB, THIRD), f32

    # fc4 on the VPU/XLU: broadcast-multiply by the (1, THIRD) weight row and
    # reduce over the lane axis; bias add in f32.
    w4_row = w4_ref[...].astype(jnp.float32)                            # (1, THIRD)
    out = jnp.sum(h * w4_row, axis=-1, keepdims=True) + b4_ref[...]     # (TB, 1)

    o_ref[...] = out.astype(o_ref.dtype)


def neural_net_forward(x, params, *, block_batch=512, compute_dtype=jnp.float32):
    """Forward pass. x: (batch, 342) (or pre-padded (batch, 384)).

    For best HBM efficiency on v6e/v7x, pass compute_dtype=jnp.bfloat16 and
    keep x stored pre-padded / pre-cast so the pad+cast below are no-ops.
    """
    batch = x.shape[0]

    if x.shape[1] == OBS:
        x = jnp.pad(x, ((0, 0), (0, OBS_PAD - OBS)))
    assert x.shape[1] == OBS_PAD, "x must have 342 (or pre-padded 384) features"

    # Batch tile: >=512 rows for large batches (multiple of 256 matches the
    # v6e/v7x MXU cadence and amortizes per-grid-step overhead); for tiny
    # batches collapse to a single grid step (padded batch), i.e. no extra
    # per-step overhead vs. a grid-less call.
    tb = min(_round_up(block_batch, 8), _round_up(batch, 8))
    padded = _round_up(batch, tb)
    if padded != batch:
        x = jnp.pad(x, ((0, padded - batch), (0, 0)))   # tail rows sliced off below

    x = x.astype(compute_dtype)
    w1 = params["w1"].astype(compute_dtype)
    w2 = params["w2"].astype(compute_dtype)
    w3 = params["w3"].astype(compute_dtype)
    w4 = params["w4"].astype(compute_dtype)
    b1, b2, b3, b4 = params["b1"], params["b2"], params["b3"], params["b4"]

    const = lambda i: (0, 0)   # same block every step -> Pallas skips the re-DMA
    grid = (padded // tb,)

    out = pl.pallas_call(
        mlp_kernel,
        out_shape=jax.ShapeDtypeStruct((padded, 1), jnp.float32),
        grid=grid,
        in_specs=[
            pl.BlockSpec((tb, OBS_PAD), lambda i: (i, 0)),    # x: tiled over batch
            pl.BlockSpec((OBS_PAD, FIRST), const),            # w1 (resident)
            pl.BlockSpec((1, FIRST), const),                  # b1
            pl.BlockSpec((FIRST, SECOND), const),             # w2
            pl.BlockSpec((1, SECOND), const),                 # b2
            pl.BlockSpec((SECOND, THIRD), const),             # w3
            pl.BlockSpec((1, THIRD), const),                  # b3
            pl.BlockSpec((1, THIRD), const),                  # w4 row
            pl.BlockSpec((1, 1), const),                      # b4
        ],
        out_specs=pl.BlockSpec((tb, 1), lambda i: (i, 0)),
        compiler_params=pltpu.CompilerParams(
            dimension_semantics=("parallel",)),               # v7x: 2 TCs share batch
    )(x, w1, b1, w2, b2, w3, b3, w4, b4)

    return out[:batch]


def xavier_uniform_t(key, fan_out, fan_in):
    """torch.nn.init.xavier_uniform_ on a (fan_out, fan_in) weight, transposed
    to (fan_in, fan_out) for the x @ W convention."""
    limit = math.sqrt(6.0 / (fan_in + fan_out))
    w = jax.random.uniform(key, (fan_out, fan_in), jnp.float32, -limit, limit)
    return w.T


def init_params(key):
    k1, k2, k3, k4 = jax.random.split(key, 4)
    w1 = xavier_uniform_t(k1, FIRST, OBS)                 # (342, 128)
    w1 = jnp.pad(w1, ((0, OBS_PAD - OBS), (0, 0)))        # (384, 128): zero pad rows
    return {
        "w1": w1,
        "b1": jnp.zeros((1, FIRST), jnp.float32),
        "w2": xavier_uniform_t(k2, SECOND, FIRST),        # (128, 64)
        "b2": jnp.zeros((1, SECOND), jnp.float32),
        "w3": xavier_uniform_t(k3, THIRD, SECOND),        # (64, 32)
        "b3": jnp.zeros((1, THIRD), jnp.float32),
        "w4": xavier_uniform_t(k4, 1, THIRD).T,           # (1, 32) row for the VPU fc4
        "b4": jnp.zeros((1, 1), jnp.float32),
    }


def reference_forward(x, params):
    """Plain-JAX reference (f32), identical math to the PyTorch forward()."""
    w1 = params["w1"][:OBS]                               # drop the zero-pad rows
    h = jnp.maximum(x @ w1 + params["b1"], 0.0)
    h = jnp.maximum(h @ params["w2"] + params["b2"], 0.0)
    h = jnp.maximum(h @ params["w3"] + params["b3"], 0.0)
    return h @ params["w4"].T + params["b4"]


if __name__ == "__main__":
    key = jax.random.PRNGKey(0)
    k_params, k_x1, k_x2 = jax.random.split(key, 3)
    params = init_params(k_params)

    # Small batch: grid degenerates to a single step (latency-bound path).
    x_small = jax.random.normal(k_x1, (8, OBS), jnp.float32)
    out_small = jax.block_until_ready(neural_net_forward(x_small, params))
    ref_small = reference_forward(x_small, params)
    assert out_small.shape == (8, 1)
    assert jnp.allclose(out_small, ref_small, atol=1e-4, rtol=1e-4)

    # Larger, non-tile-multiple batch: exercises the tiled/pipelined grid,
    # resident weights, and batch tail padding (300 -> 3 tiles of 128).
    x_big = jax.random.normal(k_x2, (300, OBS), jnp.float32)
    ref_big = reference_forward(x_big, params)

    out_f32 = jax.block_until_ready(
        neural_net_forward(x_big, params, block_batch=128,
                           compute_dtype=jnp.float32))
    assert out_f32.shape == (300, 1)
    assert jnp.allclose(out_f32, ref_big, atol=1e-4, rtol=1e-4)

    # bf16 operands (f32 accumulation): halves HBM bytes for x; looser check.
    out_bf16 = jax.block_until_ready(
        neural_net_forward(x_big, params, block_batch=128,
                           compute_dtype=jnp.bfloat16))
    assert out_bf16.shape == (300, 1)
    assert jnp.allclose(out_bf16, ref_big, atol=1e-1, rtol=1e-1)

    print("KERNEL_OK")
</pallas_src>

<mosaic_0001>
module attributes {stable_mosaic.version = 11 : i64} {
  func.func @mlp_kernel(%arg0: i32, %arg1: memref<8x384xf32, #tpu.memory_space<vmem>>, %arg2: memref<384x128xf32, #tpu.memory_space<vmem>>, %arg3: memref<1x128xf32, #tpu.memory_space<vmem>>, %arg4: memref<128x64xf32, #tpu.memory_space<vmem>>, %arg5: memref<1x64xf32, #tpu.memory_space<vmem>>, %arg6: memref<64x32xf32, #tpu.memory_space<vmem>>, %arg7: memref<1x32xf32, #tpu.memory_space<vmem>>, %arg8: memref<1x32xf32, #tpu.memory_space<vmem>>, %arg9: memref<1x1xf32, #tpu.memory_space<vmem>>, %arg10: memref<8x1xf32, #tpu.memory_space<vmem>>) attributes {dimension_semantics = [#tpu.dimension_semantics<parallel>], iteration_bounds = array<i64: 1>, scalar_prefetch = 0 : i64, scratch_operands = 0 : i64, tpu.core_type = #tpu.core_type<tc>, window_params = [{transform_indices = @transform_0, window_bounds = array<i64: 8, 384>}, {pipeline_mode = #tpu.pipeline_mode<synchronous>, transform_indices = @transform_1, window_bounds = array<i64: 384, 128>}, {pipeline_mode = #tpu.pipeline_mode<synchronous>, transform_indices = @transform_2, window_bounds = array<i64: 1, 128>}, {pipeline_mode = #tpu.pipeline_mode<synchronous>, transform_indices = @transform_3, window_bounds = array<i64: 128, 64>}, {pipeline_mode = #tpu.pipeline_mode<synchronous>, transform_indices = @transform_4, window_bounds = array<i64: 1, 64>}, {pipeline_mode = #tpu.pipeline_mode<synchronous>, transform_indices = @transform_5, window_bounds = array<i64: 64, 32>}, {pipeline_mode = #tpu.pipeline_mode<synchronous>, transform_indices = @transform_6, window_bounds = array<i64: 1, 32>}, {pipeline_mode = #tpu.pipeline_mode<synchronous>, transform_indices = @transform_7, window_bounds = array<i64: 1, 32>}, {pipeline_mode = #tpu.pipeline_mode<synchronous>, transform_indices = @transform_8, window_bounds = array<i64: 1, 1>}, {transform_indices = @transform_9, window_bounds = array<i64: 8, 1>}]} {
    %c0 = arith.constant 0 : index
    %c0_0 = arith.constant 0 : index
    %0 = vector.load %arg1[%c0, %c0_0] : memref<8x384xf32, #tpu.memory_space<vmem>>, vector<8x384xf32>
    %c0_1 = arith.constant 0 : index
    %c0_2 = arith.constant 0 : index
    %1 = vector.load %arg2[%c0_1, %c0_2] : memref<384x128xf32, #tpu.memory_space<vmem>>, vector<384x128xf32>
    %cst = arith.constant dense<0.000000e+00> : vector<8x128xf32>
    %2 = tpu.matmul %0, %1, %cst {dimension_numbers = #tpu.dot_dimension_numbers<[1], [0], [0], [1], [0, 0, 1, 1], [], []>} : vector<8x384xf32>, vector<384x128xf32>, vector<8x128xf32> -> vector<8x128xf32>
    %c0_3 = arith.constant 0 : index
    %c0_4 = arith.constant 0 : index
    %3 = vector.load %arg3[%c0_3, %c0_4] : memref<1x128xf32, #tpu.memory_space<vmem>>, vector<1x128xf32>
    %4 = vector.broadcast %3 : vector<1x128xf32> to vector<8x128xf32>
    %5 = arith.addf %2, %4 : vector<8x128xf32>
    %cst_5 = arith.constant 0.000000e+00 : f32
    %6 = vector.broadcast %cst_5 : f32 to vector<8x128xf32>
    %7 = arith.maximumf %5, %6 : vector<8x128xf32>
    %c0_6 = arith.constant 0 : index
    %c0_7 = arith.constant 0 : index
    %8 = vector.load %arg4[%c0_6, %c0_7] : memref<128x64xf32, #tpu.memory_space<vmem>>, vector<128x64xf32>
    %cst_8 = arith.constant dense<0.000000e+00> : vector<8x64xf32>
    %9 = tpu.matmul %7, %8, %cst_8 {dimension_numbers = #tpu.dot_dimension_numbers<[1], [0], [0], [1], [0, 0, 1, 1], [], []>} : vector<8x128xf32>, vector<128x64xf32>, vector<8x64xf32> -> vector<8x64xf32>
    %c0_9 = arith.constant 0 : index
    %c0_10 = arith.constant 0 : index
    %10 = vector.load %arg5[%c0_9, %c0_10] : memref<1x64xf32, #tpu.memory_space<vmem>>, vector<1x64xf32>
    %11 = vector.broadcast %10 : vector<1x64xf32> to vector<8x64xf32>
    %12 = arith.addf %9, %11 : vector<8x64xf32>
    %cst_11 = arith.constant 0.000000e+00 : f32
    %13 = vector.broadcast %cst_11 : f32 to vector<8x64xf32>
    %14 = arith.maximumf %12, %13 : vector<8x64xf32>
    %c0_12 = arith.constant 0 : index
    %c0_13 = arith.constant 0 : index
    %15 = vector.load %arg6[%c0_12, %c0_13] : memref<64x32xf32, #tpu.memory_space<vmem>>, vector<64x32xf32>
    %cst_14 = arith.constant dense<0.000000e+00> : vector<8x32xf32>
    %16 = tpu.matmul %14, %15, %cst_14 {dimension_numbers = #tpu.dot_dimension_numbers<[1], [0], [0], [1], [0, 0, 1, 1], [], []>} : vector<8x64xf32>, vector<64x32xf32>, vector<8x32xf32> -> vector<8x32xf32>
    %c0_15 = arith.constant 0 : index
    %c0_16 = arith.constant 0 : index
    %17 = vector.load %arg7[%c0_15, %c0_16] : memref<1x32xf32, #tpu.memory_space<vmem>>, vector<1x32xf32>
    %18 = vector.broadcast %17 : vector<1x32xf32> to vector<8x32xf32>
    %19 = arith.addf %16, %18 : vector<8x32xf32>
    %cst_17 = arith.constant 0.000000e+00 : f32
    %20 = vector.broadcast %cst_17 : f32 to vector<8x32xf32>
    %21 = arith.maximumf %19, %20 : vector<8x32xf32>
    %c0_18 = arith.constant 0 : index
    %c0_19 = arith.constant 0 : index
    %22 = vector.load %arg8[%c0_18, %c0_19] : memref<1x32xf32, #tpu.memory_space<vmem>>, vector<1x32xf32>
    %23 = vector.broadcast %22 : vector<1x32xf32> to vector<8x32xf32>
    %24 = arith.mulf %21, %23 : vector<8x32xf32>
    %cst_20 = arith.constant dense<0.000000e+00> : vector<8xf32>
    %25 = vector.multi_reduction <add>, %24, %cst_20 [1] : vector<8x32xf32> to vector<8xf32>
    %26 = vector.shape_cast %25 : vector<8xf32> to vector<8x1xf32>
    %c0_21 = arith.constant 0 : index
    %c0_22 = arith.constant 0 : index
    %27 = vector.load %arg9[%c0_21, %c0_22] : memref<1x1xf32, #tpu.memory_space<vmem>>, vector<1x1xf32>
    %28 = vector.broadcast %27 : vector<1x1xf32> to vector<8x1xf32>
    %29 = arith.addf %26, %28 : vector<8x1xf32>
    %c0_23 = arith.constant 0 : index
    %c0_24 = arith.constant 0 : index
    %30 = vector.load %arg10[%c0_23, %c0_24] : memref<8x1xf32, #tpu.memory_space<vmem>>, vector<8x1xf32>
    tpu.vector_store %arg10[%c0_23, %c0_24], %29 {strides = array<i32>} : memref<8x1xf32, #tpu.memory_space<vmem>>, vector<8x1xf32>,
    return
  }
  func.func @transform_0(%arg0: i32) -> (i32, i32) {
    %c0_i32 = arith.constant 0 : i32
    %c0_i32_0 = arith.constant 0 : i32
    return %arg0, %c0_i32 : i32, i32
  }
  func.func @transform_1(%arg0: i32) -> (i32, i32) {
    %c0_i32 = arith.constant 0 : i32
    %c0_i32_0 = arith.constant 0 : i32
    %c0_i32_1 = arith.constant 0 : i32
    return %c0_i32, %c0_i32_0 : i32, i32
  }
  func.func @transform_2(%arg0: i32) -> (i32, i32) {
    %c0_i32 = arith.constant 0 : i32
    %c0_i32_0 = arith.constant 0 : i32
    %c0_i32_1 = arith.constant 0 : i32
    return %c0_i32, %c0_i32_0 : i32, i32
  }
  func.func @transform_3(%arg0: i32) -> (i32, i32) {
    %c0_i32 = arith.constant 0 : i32
    %c0_i32_0 = arith.constant 0 : i32
    %c0_i32_1 = arith.constant 0 : i32
    return %c0_i32, %c0_i32_0 : i32, i32
  }
  func.func @transform_4(%arg0: i32) -> (i32, i32) {
    %c0_i32 = arith.constant 0 : i32
    %c0_i32_0 = arith.constant 0 : i32
    %c0_i32_1 = arith.constant 0 : i32
    return %c0_i32, %c0_i32_0 : i32, i32
  }
  func.func @transform_5(%arg0: i32) -> (i32, i32) {
    %c0_i32 = arith.constant 0 : i32
    %c0_i32_0 = arith.constant 0 : i32
    %c0_i32_1 = arith.constant 0 : i32
    return %c0_i32, %c0_i32_0 : i32, i32
  }
  func.func @transform_6(%arg0: i32) -> (i32, i32) {
    %c0_i32 = arith.constant 0 : i32
    %c0_i32_0 = arith.constant 0 : i32
    %c0_i32_1 = arith.constant 0 : i32
    return %c0_i32, %c0_i32_0 : i32, i32
  }
  func.func @transform_7(%arg0: i32) -> (i32, i32) {
    %c0_i32 = arith.constant 0 : i32
    %c0_i32_0 = arith.constant 0 : i32
    %c0_i32_1 = arith.constant 0 : i32
    return %c0_i32, %c0_i32_0 : i32, i32
  }
  func.func @transform_8(%arg0: i32) -> (i32, i32) {
    %c0_i32 = arith.constant 0 : i32
    %c0_i32_0 = arith.constant 0 : i32
    %c0_i32_1 = arith.constant 0 : i32
    return %c0_i32, %c0_i32_0 : i32, i32
  }
  func.func @transform_9(%arg0: i32) -> (i32, i32) {
    %c0_i32 = arith.constant 0 : i32
    %c0_i32_0 = arith.constant 0 : i32
    return %arg0, %c0_i32 : i32, i32
  }
}

</mosaic_0001>

<llo_original>
// kernel: tpu_custom_call.1
$region0: #{tpu_custom_call.1}
  #allocation0 [shape = 'u32[]', space=smem, size = 0x4, offset = 0x4, fixed_abs, tag = 'smem constant byte address 0x4 - core index']
  #allocation1 [shape = 'u32[144,128]{1,0:T(1,128)}', space=vmem, size = 0x12000, scoped, tag = 'internal scratch']
  #allocation2 [shape = 'f32[1,1]{1,0:T(1,128)S(1)}', space=vmem, size = 0x200, scoped, tag = 'scoped memory for tpu_custom_call.1']
  %s0 = inlined_call_operand.vmem [shape: f32[8,384], index: 0, kind: input, shape index: {}]
  %s1 = inlined_call_operand.hbm [shape: f32[384,128], index: 1, kind: input, shape index: {}]
  %s2 = inlined_call_operand.vmem [shape: f32[1,128], index: 2, kind: input, shape index: {}]
  %s3 = inlined_call_operand.vmem [shape: f32[128,64], index: 3, kind: input, shape index: {}]
  %s4 = inlined_call_operand.vmem [shape: f32[1,64], index: 4, kind: input, shape index: {}]
  %s5 = inlined_call_operand.vmem [shape: f32[64,32], index: 5, kind: input, shape index: {}]
  %s6 = inlined_call_operand.vmem [shape: f32[1,32], index: 6, kind: input, shape index: {}]
  %s7 = inlined_call_operand.vmem [shape: f32[1,32], index: 7, kind: input, shape index: {}]
  %s8 = inlined_call_operand.<no memory space> [shape: f32[1,1], index: 8, kind: input, shape index: {}]
  %s9 = inlined_call_operand.vmem [shape: f32[8,1], index: 9, kind: output, shape index: {}]
  %s10 = sld [smem:[#allocation0]]
  $region50: #{tpu_custom_call.1} parent=0
    _
  %s12 = ssub.s32 1, %s10
  %s13 = scalar_select 0, %s12, %s10
  %v14 = vstv %s8
  %15 = vst [vmem:[#allocation2] sm:$0x1] %v14
  $region1: #{tpu_custom_call.1} parent=0
    #allocation3 [shape = 'u8[196608]{0}', space=vmem, size = 0x30000, scoped, tag = 'input window, operand 1, single buffered']
    #allocation4 [shape = 's32[1]{0}', space=sflag, size = 0x4, scoped, tag = 'scoped memory for tpu_custom_call.1']
    %16 = vsyncpa [#allocation4], 0
    // Predicated region
    $region2: #{tpu_custom_call.1} parent=1 // pred_check
      _
    $region3: #{tpu_custom_call.1} parent=1 // pred_check_branch
      %18 = sbr.rel (0) target = $region5
    $region4: #{tpu_custom_call.1} parent=1 // pred_region
      _
    $region5: #{tpu_custom_call.1} parent=1 // pred_fallthru
      _
    // Predicated region
    $region6: #{tpu_custom_call.1} parent=1 // pred_check
      _
    $region7: #{tpu_custom_call.1} parent=1 // pred_check_branch
      %20 = sbr.rel (0) target = $region9
    $region8: #{tpu_custom_call.1} parent=1 // pred_region
      %s22 = ssub.s32 6144, 6144
      %23 = vsyncadd [#allocation4], %s22
      %s24 = sshll.u32 [#allocation3], 4
      %s25 = int_to_ptr.vmem [resolvable:$true] %s24
      %30 = dma.hbm_to_vmem [thread:$0]  %s1, 6144, %s25, [#allocation4], 128, 128, 8
    $region9: #{tpu_custom_call.1} parent=1 // pred_fallthru
      _
    // Predicated region
    $region10: #{tpu_custom_call.1} parent=1 // pred_check
      _
    $region11: #{tpu_custom_call.1} parent=1 // pred_check_branch
      %32 = sbr.rel (0) target = $region13
    $region12: #{tpu_custom_call.1} parent=1 // pred_region
      _
    $region13: #{tpu_custom_call.1} parent=1 // pred_fallthru
      _
    // Predicated region
    $region14: #{tpu_custom_call.1} parent=1 // pred_check
      _
    $region15: #{tpu_custom_call.1} parent=1 // pred_check_branch
      %34 = sbr.rel (0) target = $region17
    $region16: #{tpu_custom_call.1} parent=1 // pred_region
      _
    $region17: #{tpu_custom_call.1} parent=1 // pred_fallthru
      _
    // Predicated region
    $region18: #{tpu_custom_call.1} parent=1 // pred_check
      _
    $region19: #{tpu_custom_call.1} parent=1 // pred_check_branch
      %36 = sbr.rel (0) target = $region21
    $region20: #{tpu_custom_call.1} parent=1 // pred_region
      _
    $region21: #{tpu_custom_call.1} parent=1 // pred_fallthru
      _
    // Predicated region
    $region22: #{tpu_custom_call.1} parent=1 // pred_check
      _
    $region23: #{tpu_custom_call.1} parent=1 // pred_check_branch
      %38 = sbr.rel (0) target = $region25
    $region24: #{tpu_custom_call.1} parent=1 // pred_region
      _
    $region25: #{tpu_custom_call.1} parent=1 // pred_fallthru
      _
    // Predicated region
    $region26: #{tpu_custom_call.1} parent=1 // pred_check
      _
    $region27: #{tpu_custom_call.1} parent=1 // pred_check_branch
      %40 = sbr.rel (0) target = $region29
    $region28: #{tpu_custom_call.1} parent=1 // pred_region
      _
    $region29: #{tpu_custom_call.1} parent=1 // pred_fallthru
      _
    // Predicated region
    $region30: #{tpu_custom_call.1} parent=1 // pred_check
      _
    $region31: #{tpu_custom_call.1} parent=1 // pred_check_branch
      %42 = sbr.rel (0) target = $region33
    $region32: #{tpu_custom_call.1} parent=1 // pred_region
      _
    $region33: #{tpu_custom_call.1} parent=1 // pred_fallthru
      _
    // Predicated region
    $region34: #{tpu_custom_call.1} parent=1 // pred_check
      _
    $region35: #{tpu_custom_call.1} parent=1 // pred_check_branch
      %44 = sbr.rel (0) target = $region37
    $region36: #{tpu_custom_call.1} parent=1 // pred_region
      _
    $region37: #{tpu_custom_call.1} parent=1 // pred_fallthru
      _
    // Predicated region
    $region38: #{tpu_custom_call.1} parent=1 // pred_check
      _
    $region39: #{tpu_custom_call.1} parent=1 // pred_check_branch
      %46 = sbr.rel (0) target = $region41
    $region40: #{tpu_custom_call.1} parent=1 // pred_region
      %47 = dma.done [#allocation4], 6144
    $region41: #{tpu_custom_call.1} parent=1 // pred_fallthru
      _
    %v48 = vld [vmem:[%s0] sm:$0xff]
    %v49 = vld [vmem:[%s0 + $0x8] sm:$0xff]
    %v50 = vld [vmem:[%s0 + $0x10] sm:$0xff]
    %v51 = vld [vmem:[#allocation3] sm:$0xff]
    %v52 = vld [vmem:[#allocation3 + $0x8] sm:$0xff]
    %v53 = vld [vmem:[#allocation3 + $0x10] sm:$0xff]
    %v54 = vld [vmem:[#allocation3 + $0x18] sm:$0xff]
    %v55 = vld [vmem:[#allocation3 + $0x20] sm:$0xff]
    %v56 = vld [vmem:[#allocation3 + $0x28] sm:$0xff]
    %v57 = vld [vmem:[#allocation3 + $0x30] sm:$0xff]
    %v58 = vld [vmem:[#allocation3 + $0x38] sm:$0xff]
    %v59 = vld [vmem:[#allocation3 + $0x40] sm:$0xff]
    %v60 = vld [vmem:[#allocation3 + $0x48] sm:$0xff]
    %v61 = vld [vmem:[#allocation3 + $0x50] sm:$0xff]
    %v62 = vld [vmem:[#allocation3 + $0x58] sm:$0xff]
    %v63 = vld [vmem:[#allocation3 + $0x60] sm:$0xff]
    %v64 = vld [vmem:[#allocation3 + $0x68] sm:$0xff]
    %v65 = vld [vmem:[#allocation3 + $0x70] sm:$0xff]
    %v66 = vld [vmem:[#allocation3 + $0x78] sm:$0xff]
    %v67 = vld [vmem:[#allocation3 + $0x80] sm:$0xff]
    %v68 = vld [vmem:[#allocation3 + $0x88] sm:$0xff]
    %v69 = vld [vmem:[#allocation3 + $0x90] sm:$0xff]
    %v70 = vld [vmem:[#allocation3 + $0x98] sm:$0xff]
    %v71 = vld [vmem:[#allocation3 + $0xa0] sm:$0xff]
    %v72 = vld [vmem:[#allocation3 + $0xa8] sm:$0xff]
    %v73 = vld [vmem:[#allocation3 + $0xb0] sm:$0xff]
    %v74 = vld [vmem:[#allocation3 + $0xb8] sm:$0xff]
    %v75 = vld [vmem:[#allocation3 + $0xc0] sm:$0xff]
    %v76 = vld [vmem:[#allocation3 + $0xc8] sm:$0xff]
    %v77 = vld [vmem:[#allocation3 + $0xd0] sm:$0xff]
    %v78 = vld [vmem:[#allocation3 + $0xd8] sm:$0xff]
    %v79 = vld [vmem:[#allocation3 + $0xe0] sm:$0xff]
    %v80 = vld [vmem:[#allocation3 + $0xe8] sm:$0xff]
    %v81 = vld [vmem:[#allocation3 + $0xf0] sm:$0xff]
    %v82 = vld [vmem:[#allocation3 + $0xf8] sm:$0xff]
    %v83 = vld [vmem:[#allocation3 + $0x100] sm:$0xff]
    %v84 = vld [vmem:[#allocation3 + $0x108] sm:$0xff]
    %v85 = vld [vmem:[#allocation3 + $0x110] sm:$0xff]
    %v86 = vld [vmem:[#allocation3 + $0x118] sm:$0xff]
    %v87 = vld [vmem:[#allocation3 + $0x120] sm:$0xff]
    %v88 = vld [vmem:[#allocation3 + $0x128] sm:$0xff]
    %v89 = vld [vmem:[#allocation3 + $0x130] sm:$0xff]
    %v90 = vld [vmem:[#allocation3 + $0x138] sm:$0xff]
    %v91 = vld [vmem:[#allocation3 + $0x140] sm:$0xff]
    %v92 = vld [vmem:[#allocation3 + $0x148] sm:$0xff]
    %v93 = vld [vmem:[#allocation3 + $0x150] sm:$0xff]
    %v94 = vld [vmem:[#allocation3 + $0x158] sm:$0xff]
    %v95 = vld [vmem:[#allocation3 + $0x160] sm:$0xff]
    %v96 = vld [vmem:[#allocation3 + $0x168] sm:$0xff]
    %v97 = vld [vmem:[#allocation3 + $0x170] sm:$0xff]
    %v98 = vld [vmem:[#allocation3 + $0x178] sm:$0xff]
    %v99 = vld [vmem:[%s2] sm:$0x1]
    %v101 = vlaneseq
    %v102 = vshrl.u32 %v101, 7
    %v103 = vsub.s32 0, %v102
    %v104 = vrot.slane %v99, %v103
    %106 = vmatprep.subr.mxu0 0.0
    %107 = vmatpush1.msra.mxu0 %v51
    %108 = vmatprep.subr.mxu0 0.0
    %109 = vmatpush1.msra.mxu0 %v52
    %110 = vmatprep.subr.mxu0 0.0
    %111 = vmatpush1.msra.mxu0 %v53
    %112 = vmatprep.subr.mxu0 0.0
    %113 = vmatpush1.msra.mxu0 %v54
    %114 = vmatprep.subr.mxu0 0.0
    %115 = vmatpush1.msra.mxu0 %v55
    %116 = vmatprep.subr.mxu0 0.0
    %117 = vmatpush1.msra.mxu0 %v56
    %118 = vmatprep.subr.mxu0 0.0
    %119 = vmatpush1.msra.mxu0 %v57
    %120 = vmatprep.subr.mxu0 0.0
    %121 = vmatpush1.msra.mxu0 %v58
    %122 = vmatprep.subr.mxu0 0.0
    %123 = vmatpush1.msra.mxu0 %v59
    %124 = vmatprep.subr.mxu0 0.0
    %125 = vmatpush1.msra.mxu0 %v60
    %126 = vmatprep.subr.mxu0 0.0
    %127 = vmatpush1.msra.mxu0 %v61
    %128 = vmatprep.subr.mxu0 0.0
    %129 = vmatpush1.msra.mxu0 %v62
    %130 = vmatprep.subr.mxu0 0.0
    %131 = vmatpush1.msra.mxu0 %v63
    %132 = vmatprep.subr.mxu0 0.0
    %133 = vmatpush1.msra.mxu0 %v64
    %134 = vmatprep.subr.mxu0 0.0
    %135 = vmatpush1.msra.mxu0 %v65
    %136 = vmatprep.subr.mxu0 0.0
    %137 = vmatpush1.msra.mxu0 %v66
    %138 = vmatprep.subr.mxu0 0.0
    %139 = vmatpush1.msra.mxu0 %v67
    %140 = vmatprep.subr.mxu0 0.0
    %141 = vmatpush1.msra.mxu0 %v68
    %142 = vmatprep.subr.mxu0 0.0
    %143 = vmatpush1.msra.mxu0 %v69
    %144 = vmatprep.subr.mxu0 0.0
    %145 = vmatpush1.msra.mxu0 %v70
    %146 = vmatprep.subr.mxu0 0.0
    %147 = vmatpush1.msra.mxu0 %v71
    %148 = vmatprep.subr.mxu0 0.0
    %149 = vmatpush1.msra.mxu0 %v72
    %150 = vmatprep.subr.mxu0 0.0
    %151 = vmatpush1.msra.mxu0 %v73
    %152 = vmatprep.subr.mxu0 0.0
    %153 = vmatpush1.msra.mxu0 %v74
    %154 = vmatprep.subr.mxu0 0.0
    %155 = vmatpush1.msra.mxu0 %v75
    %156 = vmatprep.subr.mxu0 0.0
    %157 = vmatpush1.msra.mxu0 %v76
    %158 = vmatprep.subr.mxu0 0.0
    %159 = vmatpush1.msra.mxu0 %v77
    %160 = vmatprep.subr.mxu0 0.0
    %161 = vmatpush1.msra.mxu0 %v78
    %162 = vmatprep.subr.mxu0 0.0
    %163 = vmatpush1.msra.mxu0 %v79
    %164 = vmatprep.subr.mxu0 0.0
    %165 = vmatpush1.msra.mxu0 %v80
    %166 = vmatprep.subr.mxu0 0.0
    %167 = vmatpush1.msra.mxu0 %v81
    %168 = vmatprep.subr.mxu0 0.0
    %169 = vmatpush1.msra.mxu0 %v82
    %170 = vmatprep.mubr.f32.mxu0 %v49
    %171 = vmatmul.mubr.f32.gmra.mrb[0].mxu0 %v48
    %v172 = vpop.f32.mrb[0].mxu0
    %v173 = vadd.f32 %v104, %v172
    %v174 = vpop.f32.mrb[0].mxu0
    %175 = vdwg.mxu0
    %176 = vmatprep.subr.mxu0 0.0
    %177 = vmatpush1.msra.mxu0 %v83
    %178 = vmatprep.subr.mxu0 0.0
    %179 = vmatpush1.msra.mxu0 %v84
    %180 = vmatprep.subr.mxu0 0.0
    %181 = vmatpush1.msra.mxu0 %v85
    %182 = vmatprep.subr.mxu0 0.0
    %183 = vmatpush1.msra.mxu0 %v86
    %184 = vmatprep.subr.mxu0 0.0
    %185 = vmatpush1.msra.mxu0 %v87
    %186 = vmatprep.subr.mxu0 0.0
    %187 = vmatpush1.msra.mxu0 %v88
    %188 = vmatprep.subr.mxu0 0.0
    %189 = vmatpush1.msra.mxu0 %v89
    %190 = vmatprep.subr.mxu0 0.0
    %191 = vmatpush1.msra.mxu0 %v90
    %192 = vmatprep.subr.mxu0 0.0
    %193 = vmatpush1.msra.mxu0 %v91
    %194 = vmatprep.subr.mxu0 0.0
    %195 = vmatpush1.msra.mxu0 %v92
    %196 = vmatprep.subr.mxu0 0.0
    %197 = vmatpush1.msra.mxu0 %v93
    %198 = vmatprep.subr.mxu0 0.0
    %199 = vmatpush1.msra.mxu0 %v94
    %200 = vmatprep.subr.mxu0 0.0
    %201 = vmatpush1.msra.mxu0 %v95
    %202 = vmatprep.subr.mxu0 0.0
    %203 = vmatpush1.msra.mxu0 %v96
    %204 = vmatprep.subr.mxu0 0.0
    %205 = vmatpush1.msra.mxu0 %v97
    %206 = vmatprep.subr.mxu0 0.0
    %207 = vmatpush1.msra.mxu0 %v98
    %208 = vmatprep.subr.mxu0 0.0
    %209 = vmatpush1.msra.mxu0 0.0
    %210 = vmatprep.subr.mxu0 0.0
    %211 = vmatpush1.msra.mxu0 0.0
    %212 = vmatprep.subr.mxu0 0.0
    %213 = vmatpush1.msra.mxu0 0.0
    %214 = vmatprep.subr.mxu0 0.0
    %215 = vmatpush1.msra.mxu0 0.0
    %216 = vmatprep.subr.mxu0 0.0
    %217 = vmatpush1.msra.mxu0 0.0
    %218 = vmatprep.subr.mxu0 0.0
    %219 = vmatpush1.msra.mxu0 0.0
    %220 = vmatprep.subr.mxu0 0.0
    %221 = vmatpush1.msra.mxu0 0.0
    %222 = vmatprep.subr.mxu0 0.0
    %223 = vmatpush1.msra.mxu0 0.0
    %224 = vmatprep.subr.mxu0 0.0
    %225 = vmatpush1.msra.mxu0 0.0
    %226 = vmatprep.subr.mxu0 0.0
    %227 = vmatpush1.msra.mxu0 0.0
    %228 = vmatprep.subr.mxu0 0.0
    %229 = vmatpush1.msra.mxu0 0.0
    %230 = vmatprep.subr.mxu0 0.0
    %231 = vmatpush1.msra.mxu0 0.0
    %232 = vmatprep.subr.mxu0 0.0
    %233 = vmatpush1.msra.mxu0 0.0
    %234 = vmatprep.subr.mxu0 0.0
    %235 = vmatpush1.msra.mxu0 0.0
    %236 = vmatprep.subr.mxu0 0.0
    %237 = vmatpush1.msra.mxu0 0.0
    %238 = vmatprep.subr.mxu0 0.0
    %239 = vmatpush1.msra.mxu0 0.0
    %240 = vmatprep.mubr.f32.mxu0 0.0
    %241 = vmatmul.mubr.f32.gmra.mrb[0].mxu0 %v50
    %v242 = vpop.f32.mrb[0].mxu0
    %v243 = vadd.f32 %v173, %v242
    %v244 = vpop.f32.mrb[0].mxu0
    %245 = vdwg.mxu0
    %v246 = vmax.f32 %v243, 0.0
    %v247 = vld [vmem:[%s3] sm:$0xff]
    %v248 = vld [vmem:[%s3 + $0x8] sm:$0xff]
    %v249 = vld [vmem:[%s3 + $0x10] sm:$0xff]
    %v250 = vld [vmem:[%s3 + $0x18] sm:$0xff]
    %v251 = vld [vmem:[%s3 + $0x20] sm:$0xff]
    %v252 = vld [vmem:[%s3 + $0x28] sm:$0xff]
    %v253 = vld [vmem:[%s3 + $0x30] sm:$0xff]
    %v254 = vld [vmem:[%s3 + $0x38] sm:$0xff]
    %v255 = vld [vmem:[%s3 + $0x40] sm:$0xff]
    %v256 = vld [vmem:[%s3 + $0x48] sm:$0xff]
    %v257 = vld [vmem:[%s3 + $0x50] sm:$0xff]
    %v258 = vld [vmem:[%s3 + $0x58] sm:$0xff]
    %v259 = vld [vmem:[%s3 + $0x60] sm:$0xff]
    %v260 = vld [vmem:[%s3 + $0x68] sm:$0xff]
    %v261 = vld [vmem:[%s3 + $0x70] sm:$0xff]
    %v262 = vld [vmem:[%s3 + $0x78] sm:$0xff]
    %v263 = vld [vmem:[%s4] sm:$0x1]
    %v265 = vlaneseq
    %v266 = vshrl.u32 %v265, 7
    %v267 = vsub.s32 0, %v266
    %v268 = vrot.slane %v263, %v267
    %270 = vmatprep.subr.mxu0 0.0
    %271 = vmatpush1.msra.mxu0 %v247
    %272 = vmatprep.subr.mxu0 0.0
    %273 = vmatpush1.msra.mxu0 %v248
    %274 = vmatprep.subr.mxu0 0.0
    %275 = vmatpush1.msra.mxu0 %v249
    %276 = vmatprep.subr.mxu0 0.0
    %277 = vmatpush1.msra.mxu0 %v250
    %278 = vmatprep.subr.mxu0 0.0
    %279 = vmatpush1.msra.mxu0 %v251
    %280 = vmatprep.subr.mxu0 0.0
    %281 = vmatpush1.msra.mxu0 %v252
    %282 = vmatprep.subr.mxu0 0.0
    %283 = vmatpush1.msra.mxu0 %v253
    %284 = vmatprep.subr.mxu0 0.0
    %285 = vmatpush1.msra.mxu0 %v254
    %286 = vmatprep.subr.mxu0 0.0
    %287 = vmatpush1.msra.mxu0 %v255
    %288 = vmatprep.subr.mxu0 0.0
    %289 = vmatpush1.msra.mxu0 %v256
    %290 = vmatprep.subr.mxu0 0.0
    %291 = vmatpush1.msra.mxu0 %v257
    %292 = vmatprep.subr.mxu0 0.0
    %293 = vmatpush1.msra.mxu0 %v258
    %294 = vmatprep.subr.mxu0 0.0
    %295 = vmatpush1.msra.mxu0 %v259
    %296 = vmatprep.subr.mxu0 0.0
    %297 = vmatpush1.msra.mxu0 %v260
    %298 = vmatprep.subr.mxu0 0.0
    %299 = vmatpush1.msra.mxu0 %v261
    %300 = vmatprep.subr.mxu0 0.0
    %301 = vmatpush1.msra.mxu0 %v262
    %302 = vmatprep.subr.mxu0 0.0
    %303 = vmatpush1.msra.mxu0 0.0
    %304 = vmatprep.subr.mxu0 0.0
    %305 = vmatpush1.msra.mxu0 0.0
    %306 = vmatprep.subr.mxu0 0.0
    %307 = vmatpush1.msra.mxu0 0.0
    %308 = vmatprep.subr.mxu0 0.0
    %309 = vmatpush1.msra.mxu0 0.0
    %310 = vmatprep.subr.mxu0 0.0
    %311 = vmatpush1.msra.mxu0 0.0
    %312 = vmatprep.subr.mxu0 0.0
    %313 = vmatpush1.msra.mxu0 0.0
    %314 = vmatprep.subr.mxu0 0.0
    %315 = vmatpush1.msra.mxu0 0.0
    %316 = vmatprep.subr.mxu0 0.0
    %317 = vmatpush1.msra.mxu0 0.0
    %318 = vmatprep.subr.mxu0 0.0
    %319 = vmatpush1.msra.mxu0 0.0
    %320 = vmatprep.subr.mxu0 0.0
    %321 = vmatpush1.msra.mxu0 0.0
    %322 = vmatprep.subr.mxu0 0.0
    %323 = vmatpush1.msra.mxu0 0.0
    %324 = vmatprep.subr.mxu0 0.0
    %325 = vmatpush1.msra.mxu0 0.0
    %326 = vmatprep.subr.mxu0 0.0
    %327 = vmatpush1.msra.mxu0 0.0
    %328 = vmatprep.subr.mxu0 0.0
    %329 = vmatpush1.msra.mxu0 0.0
    %330 = vmatprep.subr.mxu0 0.0
    %331 = vmatpush1.msra.mxu0 0.0
    %332 = vmatprep.subr.mxu0 0.0
    %333 = vmatpush1.msra.mxu0 0.0
    %334 = vmatprep.mubr.f32.mxu0 0.0
    %335 = vmatmul.mubr.f32.gmra.mrb[0].mxu0 %v246
    %v336 = vpop.f32.mrb[0].mxu0
    %v337 = vadd.f32 %v268, %v336
    %v338 = vpop.f32.mrb[0].mxu0
    %339 = vdwg.mxu0
    %v340 = vmax.f32 %v337, 0.0
    %v341 = vld [vmem:[%s5] sm:$0xff]
    %v342 = vld [vmem:[%s5 + $0x8] sm:$0xff]
    %v343 = vld [vmem:[%s5 + $0x10] sm:$0xff]
    %v344 = vld [vmem:[%s5 + $0x18] sm:$0xff]
    %v345 = vld [vmem:[%s5 + $0x20] sm:$0xff]
    %v346 = vld [vmem:[%s5 + $0x28] sm:$0xff]
    %v347 = vld [vmem:[%s5 + $0x30] sm:$0xff]
    %v348 = vld [vmem:[%s5 + $0x38] sm:$0xff]
    %v349 = vld [vmem:[%s6] sm:$0x1]
    %v351 = vlaneseq
    %v352 = vshrl.u32 %v351, 7
    %v353 = vsub.s32 0, %v352
    %v354 = vrot.slane %v349, %v353
    %vm356 = vcmask 523264
    %v358 = vsel %vm356, %v340, 0
    %360 = vmatprep.subr.mxu0 0.0
    %361 = vmatpush1.msra.mxu0 %v341
    %362 = vmatprep.subr.mxu0 0.0
    %363 = vmatpush1.msra.mxu0 %v342
    %364 = vmatprep.subr.mxu0 0.0
    %365 = vmatpush1.msra.mxu0 %v343
    %366 = vmatprep.subr.mxu0 0.0
    %367 = vmatpush1.msra.mxu0 %v344
    %368 = vmatprep.subr.mxu0 0.0
    %369 = vmatpush1.msra.mxu0 %v345
    %370 = vmatprep.subr.mxu0 0.0
    %371 = vmatpush1.msra.mxu0 %v346
    %372 = vmatprep.subr.mxu0 0.0
    %373 = vmatpush1.msra.mxu0 %v347
    %374 = vmatprep.subr.mxu0 0.0
    %375 = vmatpush1.msra.mxu0 %v348
    %376 = vmatprep.subr.mxu0 0.0
    %377 = vmatpush1.msra.mxu0 0.0
    %378 = vmatprep.subr.mxu0 0.0
    %379 = vmatpush1.msra.mxu0 0.0
    %380 = vmatprep.subr.mxu0 0.0
    %381 = vmatpush1.msra.mxu0 0.0
    %382 = vmatprep.subr.mxu0 0.0
    %383 = vmatpush1.msra.mxu0 0.0
    %384 = vmatprep.subr.mxu0 0.0
    %385 = vmatpush1.msra.mxu0 0.0
    %386 = vmatprep.subr.mxu0 0.0
    %387 = vmatpush1.msra.mxu0 0.0
    %388 = vmatprep.subr.mxu0 0.0
    %389 = vmatpush1.msra.mxu0 0.0
    %390 = vmatprep.subr.mxu0 0.0
    %391 = vmatpush1.msra.mxu0 0.0
    %392 = vmatprep.subr.mxu0 0.0
    %393 = vmatpush1.msra.mxu0 0.0
    %394 = vmatprep.subr.mxu0 0.0
    %395 = vmatpush1.msra.mxu0 0.0
    %396 = vmatprep.subr.mxu0 0.0
    %397 = vmatpush1.msra.mxu0 0.0
    %398 = vmatprep.subr.mxu0 0.0
    %399 = vmatpush1.msra.mxu0 0.0
    %400 = vmatprep.subr.mxu0 0.0
    %401 = vmatpush1.msra.mxu0 0.0
    %402 = vmatprep.subr.mxu0 0.0
    %403 = vmatpush1.msra.mxu0 0.0
    %404 = vmatprep.subr.mxu0 0.0
    %405 = vmatpush1.msra.mxu0 0.0
    %406 = vmatprep.subr.mxu0 0.0
    %407 = vmatpush1.msra.mxu0 0.0
    %408 = vmatprep.subr.mxu0 0.0
    %409 = vmatpush1.msra.mxu0 0.0
    %410 = vmatprep.subr.mxu0 0.0
    %411 = vmatpush1.msra.mxu0 0.0
    %412 = vmatprep.subr.mxu0 0.0
    %413 = vmatpush1.msra.mxu0 0.0
    %414 = vmatprep.subr.mxu0 0.0
    %415 = vmatpush1.msra.mxu0 0.0
    %416 = vmatprep.subr.mxu0 0.0
    %417 = vmatpush1.msra.mxu0 0.0
    %418 = vmatprep.subr.mxu0 0.0
    %419 = vmatpush1.msra.mxu0 0.0
    %420 = vmatprep.subr.mxu0 0.0
    %421 = vmatpush1.msra.mxu0 0.0
    %422 = vmatprep.subr.mxu0 0.0
    %423 = vmatpush1.msra.mxu0 0.0
    %424 = vmatprep.mubr.f32.mxu0 0.0
    %425 = vmatmul.mubr.f32.gmra.mrb[0].mxu0 %v358
    %v426 = vpop.f32.mrb[0].mxu0
    %v427 = vadd.f32 %v354, %v426
    %v428 = vpop.f32.mrb[0].mxu0
    %429 = vdwg.mxu0
    %v430 = vmax.f32 %v427, 0.0
    %v431 = vld [vmem:[%s7] sm:$0x1]
    %v433 = vlaneseq
    %v434 = vshrl.u32 %v433, 7
    %v435 = vsub.s32 0, %v434
    %v436 = vrot.slane %v431, %v435
    %v438 = vmul.f32 %v430, %v436
    %vm439 = vcmask 261120
    %v440 = vsel %vm439, %v438, 0.0
    %441 = vadd.xlane.f32.xlu0 %v440
    %v442 = vpop.xlane.xlu0 %441
    %v443 = vld [vmem:[#allocation2] sm:$0x1]
    %v445 = vlaneseq
    %v446 = vshrl.u32 %v445, 7
    %v447 = vsub.s32 0, %v446
    %v448 = vrot.slane %v443, %v447
    %v450 = vadd.f32 %v442, %v448
    %vm451 = vcmask 7168
    %452 = vst.msk [vmem:[%s9] sm:$0xff] %vm451, %v450
    // Predicated region
    $region42: #{tpu_custom_call.1} parent=1 // pred_check
      _
    $region43: #{tpu_custom_call.1} parent=1 // pred_check_branch
      %454 = sbr.rel (0) target = $region45
    $region44: #{tpu_custom_call.1} parent=1 // pred_region
      _
    $region45: #{tpu_custom_call.1} parent=1 // pred_fallthru
      _
    // Predicated region
    $region46: #{tpu_custom_call.1} parent=1 // pred_check
      _
    $region47: #{tpu_custom_call.1} parent=1 // pred_check_branch
      %456 = sbr.rel (0) target = $region49
    $region48: #{tpu_custom_call.1} parent=1 // pred_region
      _
    $region49: #{tpu_custom_call.1} parent=1 // pred_fallthru
      _
    %457 = vsyncpa [#allocation4], 1

</llo_original>
